<compile_context>
chip_gen: v7x
topology: tpu7x:2x2x1
jax: 0.10.0
libtpu: 0.0.40
codegen_flags: <defaults>
</compile_context>

<pallas_src>
import jax
import jax.numpy as jnp
from jax.experimental import pallas as pl
from jax.experimental.pallas import tpu as pltpu


_VMEM_LIMIT_BYTES = 32 * 1024 * 1024   # explicit scoped-VMEM limit (raises v5e's 16 MiB default)
_VMEM_BUDGET_BYTES = 24 * 1024 * 1024  # sizing budget: leave headroom under the limit


def _cdiv(a, b):
    return -(-a // b)


def _round_up(x, m):
    return ((x + m - 1) // m) * m


def _num_tensorcores():
    """TensorCores per chip: 2 on v7x (and other megacore parts), 1 on v5e/v6e."""
    try:
        kind = jax.devices()[0].device_kind.lower()
    except Exception:
        return 1
    if "lite" in kind or "v5e" in kind or "v6e" in kind:
        return 1
    for tag in ("7", "v4", "v5p"):
        if tag in kind:
            return 2
    return 1


def _feature_reduction_kernel(x_ref, w1_ref, b1_ref, w2_ref, b2_ref, o_ref):
    # x_ref : (TB, F)  input dtype (cast to the MXU dtype on the VMEM tile)
    # w1_ref: (F, H)   compute dtype (resident, single-buffered)
    # b1_ref: (1, H)   f32
    # w2_ref: (H, O)   compute dtype (resident, single-buffered)
    # b2_ref: (1, O)   f32
    # o_ref : (TB, O)  output dtype
    x = x_ref[...].astype(w1_ref.dtype)
    h = jnp.dot(x, w1_ref[...], preferred_element_type=jnp.float32)
    h = jnp.maximum(h + b1_ref[...], 0.0)     # bias + ReLU on the f32 accumulator
    h = h.astype(w2_ref.dtype)                # back to MXU-native dtype
    y = jnp.dot(h, w2_ref[...], preferred_element_type=jnp.float32)
    o_ref[...] = (y + b2_ref[...]).astype(o_ref.dtype)


def _build_call(B, F, H, O, tile_b, out_dtype, cost, single_buffer_weights):
    const_kw = {"pipeline_mode": pl.Buffered(1)} if single_buffer_weights else {}
    return pl.pallas_call(
        _feature_reduction_kernel,
        out_shape=jax.ShapeDtypeStruct((B, O), out_dtype),
        grid=(_cdiv(B, tile_b),),
        in_specs=[
            pl.BlockSpec((tile_b, F), lambda i: (i, 0)),          # x (streamed)
            pl.BlockSpec((F, H), lambda i: (0, 0), **const_kw),   # w1 (resident)
            pl.BlockSpec((1, H), lambda i: (0, 0), **const_kw),   # b1
            pl.BlockSpec((H, O), lambda i: (0, 0), **const_kw),   # w2 (resident)
            pl.BlockSpec((1, O), lambda i: (0, 0), **const_kw),   # b2
        ],
        out_specs=pl.BlockSpec((tile_b, O), lambda i: (i, 0)),
        compiler_params=pltpu.CompilerParams(
            dimension_semantics=("parallel",),
            vmem_limit_bytes=_VMEM_LIMIT_BYTES,
        ),
        cost_estimate=cost,
    )


def feature_reduction(x, w1, b1, w2, b2, *, compute_dtype=jnp.bfloat16,
                      out_dtype=None, max_tile_b=256):
    """y = relu(x @ w1 + b1) @ w2 + b2  (PyTorch: c2(relu(c1(x)))).

    x : (B, F)   w1: (F, H)   b1: (H,)   w2: (H, O)   b2: (O,)
    Weights are stored pre-transposed relative to nn.Linear ((in, out)).
    compute_dtype: MXU streaming dtype (bf16 default; f32 gives exact parity).
    out_dtype: defaults to x.dtype; pass jnp.bfloat16 to halve write bandwidth.
    """
    B, F = x.shape
    H = w1.shape[1]
    O = w2.shape[1]
    out_dtype = x.dtype if out_dtype is None else out_dtype

    x_it = jnp.dtype(x.dtype).itemsize
    w_it = jnp.dtype(compute_dtype).itemsize
    o_it = jnp.dtype(out_dtype).itemsize

    # Sublane packing for the batch (second-minor) axis of the x/out tiles.
    sub = 16 if min(x_it, o_it) == 2 else 8

    # ---- tile_b from an explicit VMEM budget -------------------------------
    # Resident (constant-index) operands, x2 so the no-Buffered(1) fallback
    # still fits.  Per-row cost: double-buffered x and out tiles, the f32
    # hidden activation, and the in-kernel cast copy of the x tile.
    resident = F * H * w_it + H * O * w_it + (H + O) * 4
    per_row = 2 * F * x_it + 2 * O * o_it + 4 * H + F * w_it
    avail = _VMEM_BUDGET_BYTES - 2 * resident
    if avail > per_row * sub:
        tile_cap = max(sub, (avail // per_row) // sub * sub)
    else:
        tile_cap = sub

    want_split = _num_tensorcores() >= 2 and B > sub   # only v7x-class chips
    fits_single = min(max_tile_b, tile_cap) >= B

    if fits_single and not want_split:
        # One block covering the whole batch: block dim == array dim, so no
        # padding / masking at all (best for small B on 1-TC chips).
        tile_b = B
    else:
        tile_b = max(sub, (min(max_tile_b, tile_cap) // sub) * sub)
        if want_split:
            # Keep an even number of "parallel" grid steps so both
            # TensorCores get balanced work.
            steps = _cdiv(B, tile_b)
            if steps % 2 == 1:
                steps = 2 if steps == 1 else steps + 1
                tile_b = max(sub, _round_up(_cdiv(B, steps), sub))

    # ---- small parameter-side prep (no passes over the activations) --------
    w1_c = w1.astype(compute_dtype)
    w2_c = w2.astype(compute_dtype)
    b1_2d = b1.astype(jnp.float32).reshape(1, H)
    b2_2d = b2.astype(jnp.float32).reshape(1, O)

    cost = pl.CostEstimate(
        flops=2 * B * F * H + 2 * B * H * O,
        transcendentals=0,
        bytes_accessed=(B * F * x_it + F * H * w_it + H * O * w_it
                        + (H + O) * 4 + B * O * o_it),
    )

    try:
        call = _build_call(B, F, H, O, tile_b, out_dtype, cost,
                           single_buffer_weights=True)
        return call(x, w1_c, b1_2d, w2_c, b2_2d)
    except Exception:
        # Fallback if this JAX build rejects Buffered(1) single-buffering.
        call = _build_call(B, F, H, O, tile_b, out_dtype, cost,
                           single_buffer_weights=False)
        return call(x, w1_c, b1_2d, w2_c, b2_2d)


if __name__ == "__main__":
    # Small shapes consistent with the module:
    #   inputFeature = 256 -> hidden = 128 -> outputFeature = 64, batch = 8
    B, IN_F, OUT_F = 8, 256, 64
    HID = IN_F // 2

    key = jax.random.PRNGKey(0)
    kx, kw1, kb1, kw2, kb2 = jax.random.split(key, 5)

    x = jax.random.normal(kx, (B, IN_F), dtype=jnp.float32)

    # Deterministic parameter init (kaiming-uniform-ish scale, like nn.Linear).
    lim1 = 1.0 / (IN_F ** 0.5)
    lim2 = 1.0 / (HID ** 0.5)
    # Stored pre-transposed: (in_features, out_features)
    w1 = jax.random.uniform(kw1, (IN_F, HID), minval=-lim1, maxval=lim1, dtype=jnp.float32)
    b1 = jax.random.uniform(kb1, (HID,), minval=-lim1, maxval=lim1, dtype=jnp.float32)
    w2 = jax.random.uniform(kw2, (HID, OUT_F), minval=-lim2, maxval=lim2, dtype=jnp.float32)
    b2 = jax.random.uniform(kb2, (OUT_F,), minval=-lim2, maxval=lim2, dtype=jnp.float32)

    # Pure-JAX reference (same math as the PyTorch forward).
    ref = jnp.maximum(x @ w1 + b1, 0.0) @ w2 + b2

    # f32 path: exact parity with the module's math.
    out_f32 = feature_reduction(x, w1, b1, w2, b2, compute_dtype=jnp.float32)
    jax.block_until_ready(out_f32)
    assert out_f32.shape == (B, OUT_F)
    assert jnp.allclose(out_f32, ref, atol=1e-4, rtol=1e-4), "f32 mismatch vs reference"

    # bf16 streaming path (default): looser tolerance vs the f32 reference.
    out_bf16 = feature_reduction(x, w1, b1, w2, b2)
    jax.block_until_ready(out_bf16)
    assert out_bf16.shape == (B, OUT_F)
    assert jnp.allclose(out_bf16, ref, atol=5e-2, rtol=5e-2), "bf16 mismatch vs reference"

    # Ragged batch: exercises the partial-block / equal-to-dim-block path with
    # no wrapper-side padding or slicing.
    B2 = 20
    x2 = jax.random.normal(jax.random.PRNGKey(1), (B2, IN_F), dtype=jnp.float32)
    ref2 = jnp.maximum(x2 @ w1 + b1, 0.0) @ w2 + b2
    out2 = feature_reduction(x2, w1, b1, w2, b2)
    jax.block_until_ready(out2)
    assert out2.shape == (B2, OUT_F)
    assert jnp.allclose(out2, ref2, atol=5e-2, rtol=5e-2), "ragged-batch mismatch vs reference"

    print("KERNEL_OK")
</pallas_src>

<mosaic_0001>
module attributes {stable_mosaic.version = 11 : i64} {
  func.func @_feature_reduction_kernel(%arg0: i32, %arg1: memref<8x256xf32, #tpu.memory_space<vmem>>, %arg2: memref<256x128xf32, #tpu.memory_space<vmem>>, %arg3: memref<1x128xf32, #tpu.memory_space<vmem>>, %arg4: memref<128x64xf32, #tpu.memory_space<vmem>>, %arg5: memref<1x64xf32, #tpu.memory_space<vmem>>, %arg6: memref<8x64xf32, #tpu.memory_space<vmem>>) attributes {dimension_semantics = [#tpu.dimension_semantics<parallel>], iteration_bounds = array<i64: 1>, scalar_prefetch = 0 : i64, scratch_operands = 0 : i64, tpu.core_type = #tpu.core_type<tc>, window_params = [{transform_indices = @transform_0, window_bounds = array<i64: 8, 256>}, {pipeline_mode = #tpu.pipeline_mode<synchronous>, transform_indices = @transform_1, window_bounds = array<i64: 256, 128>}, {pipeline_mode = #tpu.pipeline_mode<synchronous>, transform_indices = @transform_2, window_bounds = array<i64: 1, 128>}, {pipeline_mode = #tpu.pipeline_mode<synchronous>, transform_indices = @transform_3, window_bounds = array<i64: 128, 64>}, {pipeline_mode = #tpu.pipeline_mode<synchronous>, transform_indices = @transform_4, window_bounds = array<i64: 1, 64>}, {transform_indices = @transform_5, window_bounds = array<i64: 8, 64>}]} {
    %c0 = arith.constant 0 : index
    %c0_0 = arith.constant 0 : index
    %0 = vector.load %arg1[%c0, %c0_0] : memref<8x256xf32, #tpu.memory_space<vmem>>, vector<8x256xf32>
    %c0_1 = arith.constant 0 : index
    %c0_2 = arith.constant 0 : index
    %1 = vector.load %arg2[%c0_1, %c0_2] : memref<256x128xf32, #tpu.memory_space<vmem>>, vector<256x128xf32>
    %cst = arith.constant dense<0.000000e+00> : vector<8x128xf32>
    %2 = tpu.matmul %0, %1, %cst {dimension_numbers = #tpu.dot_dimension_numbers<[1], [0], [0], [1], [0, 0, 1, 1], [], []>} : vector<8x256xf32>, vector<256x128xf32>, vector<8x128xf32> -> vector<8x128xf32>
    %c0_3 = arith.constant 0 : index
    %c0_4 = arith.constant 0 : index
    %3 = vector.load %arg3[%c0_3, %c0_4] : memref<1x128xf32, #tpu.memory_space<vmem>>, vector<1x128xf32>
    %4 = vector.broadcast %3 : vector<1x128xf32> to vector<8x128xf32>
    %5 = arith.addf %2, %4 : vector<8x128xf32>
    %cst_5 = arith.constant 0.000000e+00 : f32
    %6 = vector.broadcast %cst_5 : f32 to vector<8x128xf32>
    %7 = arith.maximumf %5, %6 : vector<8x128xf32>
    %c0_6 = arith.constant 0 : index
    %c0_7 = arith.constant 0 : index
    %8 = vector.load %arg4[%c0_6, %c0_7] : memref<128x64xf32, #tpu.memory_space<vmem>>, vector<128x64xf32>
    %cst_8 = arith.constant dense<0.000000e+00> : vector<8x64xf32>
    %9 = tpu.matmul %7, %8, %cst_8 {dimension_numbers = #tpu.dot_dimension_numbers<[1], [0], [0], [1], [0, 0, 1, 1], [], []>} : vector<8x128xf32>, vector<128x64xf32>, vector<8x64xf32> -> vector<8x64xf32>
    %c0_9 = arith.constant 0 : index
    %c0_10 = arith.constant 0 : index
    %10 = vector.load %arg5[%c0_9, %c0_10] : memref<1x64xf32, #tpu.memory_space<vmem>>, vector<1x64xf32>
    %11 = vector.broadcast %10 : vector<1x64xf32> to vector<8x64xf32>
    %12 = arith.addf %9, %11 : vector<8x64xf32>
    %c0_11 = arith.constant 0 : index
    %c0_12 = arith.constant 0 : index
    %13 = vector.load %arg6[%c0_11, %c0_12] : memref<8x64xf32, #tpu.memory_space<vmem>>, vector<8x64xf32>
    tpu.vector_store %arg6[%c0_11, %c0_12], %12 {strides = array<i32>} : memref<8x64xf32, #tpu.memory_space<vmem>>, vector<8x64xf32>,
    return
  }
  func.func @transform_0(%arg0: i32) -> (i32, i32) {
    %c0_i32 = arith.constant 0 : i32
    %c0_i32_0 = arith.constant 0 : i32
    return %arg0, %c0_i32 : i32, i32
  }
  func.func @transform_1(%arg0: i32) -> (i32, i32) {
    %c0_i32 = arith.constant 0 : i32
    %c0_i32_0 = arith.constant 0 : i32
    %c0_i32_1 = arith.constant 0 : i32
    return %c0_i32, %c0_i32_0 : i32, i32
  }
  func.func @transform_2(%arg0: i32) -> (i32, i32) {
    %c0_i32 = arith.constant 0 : i32
    %c0_i32_0 = arith.constant 0 : i32
    %c0_i32_1 = arith.constant 0 : i32
    return %c0_i32, %c0_i32_0 : i32, i32
  }
  func.func @transform_3(%arg0: i32) -> (i32, i32) {
    %c0_i32 = arith.constant 0 : i32
    %c0_i32_0 = arith.constant 0 : i32
    %c0_i32_1 = arith.constant 0 : i32
    return %c0_i32, %c0_i32_0 : i32, i32
  }
  func.func @transform_4(%arg0: i32) -> (i32, i32) {
    %c0_i32 = arith.constant 0 : i32
    %c0_i32_0 = arith.constant 0 : i32
    %c0_i32_1 = arith.constant 0 : i32
    return %c0_i32, %c0_i32_0 : i32, i32
  }
  func.func @transform_5(%arg0: i32) -> (i32, i32) {
    %c0_i32 = arith.constant 0 : i32
    %c0_i32_0 = arith.constant 0 : i32
    return %arg0, %c0_i32 : i32, i32
  }
}

module attributes {stable_mosaic.version = 11 : i64} {
  func.func @_feature_reduction_kernel(%arg0: i32, %arg1: memref<8x256xf32, #tpu.memory_space<vmem>>, %arg2: memref<256x128xf32, #tpu.memory_space<vmem>>, %arg3: memref<1x128xf32, #tpu.memory_space<vmem>>, %arg4: memref<128x64xf32, #tpu.memory_space<vmem>>, %arg5: memref<1x64xf32, #tpu.memory_space<vmem>>, %arg6: memref<8x64xf32, #tpu.memory_space<vmem>>) attributes {dimension_semantics = [#tpu.dimension_semantics<parallel>], iteration_bounds = array<i64: 1>, scalar_prefetch = 0 : i64, scratch_operands = 0 : i64, tpu.core_type = #tpu.core_type<tc>, window_params = [{transform_indices = @transform_0, window_bounds = array<i64: 8, 256>}, {pipeline_mode = #tpu.pipeline_mode<synchronous>, transform_indices = @transform_1, window_bounds = array<i64: 256, 128>}, {pipeline_mode = #tpu.pipeline_mode<synchronous>, transform_indices = @transform_2, window_bounds = array<i64: 1, 128>}, {pipeline_mode = #tpu.pipeline_mode<synchronous>, transform_indices = @transform_3, window_bounds = array<i64: 128, 64>}, {pipeline_mode = #tpu.pipeline_mode<synchronous>, transform_indices = @transform_4, window_bounds = array<i64: 1, 64>}, {transform_indices = @transform_5, window_bounds = array<i64: 8, 64>}]} {
    %c0 = arith.constant 0 : index
    %c0_0 = arith.constant 0 : index
    %0 = vector.load %arg1[%c0, %c0_0] : memref<8x256xf32, #tpu.memory_space<vmem>>, vector<8x256xf32>
    %c0_1 = arith.constant 0 : index
    %c0_2 = arith.constant 0 : index
    %1 = vector.load %arg2[%c0_1, %c0_2] : memref<256x128xf32, #tpu.memory_space<vmem>>, vector<256x128xf32>
    %cst = arith.constant dense<0.000000e+00> : vector<8x128xf32>
    %2 = tpu.matmul %0, %1, %cst {dimension_numbers = #tpu.dot_dimension_numbers<[1], [0], [0], [1], [0, 0, 1, 1], [], []>} : vector<8x256xf32>, vector<256x128xf32>, vector<8x128xf32> -> vector<8x128xf32>
    %c0_3 = arith.constant 0 : index
    %c0_4 = arith.constant 0 : index
    %3 = vector.load %arg3[%c0_3, %c0_4] : memref<1x128xf32, #tpu.memory_space<vmem>>, vector<1x128xf32>
    %4 = vector.broadcast %3 : vector<1x128xf32> to vector<8x128xf32>
    %5 = arith.addf %2, %4 : vector<8x128xf32>
    %cst_5 = arith.constant 0.000000e+00 : f32
    %6 = vector.broadcast %cst_5 : f32 to vector<8x128xf32>
    %7 = arith.maximumf %5, %6 : vector<8x128xf32>
    %c0_6 = arith.constant 0 : index
    %c0_7 = arith.constant 0 : index
    %8 = vector.load %arg4[%c0_6, %c0_7] : memref<128x64xf32, #tpu.memory_space<vmem>>, vector<128x64xf32>
    %cst_8 = arith.constant dense<0.000000e+00> : vector<8x64xf32>
    %9 = tpu.matmul %7, %8, %cst_8 {dimension_numbers = #tpu.dot_dimension_numbers<[1], [0], [0], [1], [0, 0, 1, 1], [], []>} : vector<8x128xf32>, vector<128x64xf32>, vector<8x64xf32> -> vector<8x64xf32>
    %c0_9 = arith.constant 0 : index
    %c0_10 = arith.constant 0 : index
    %10 = vector.load %arg5[%c0_9, %c0_10] : memref<1x64xf32, #tpu.memory_space<vmem>>, vector<1x64xf32>
    %11 = vector.broadcast %10 : vector<1x64xf32> to vector<8x64xf32>
    %12 = arith.addf %9, %11 : vector<8x64xf32>
    %c0_11 = arith.constant 0 : index
    %c0_12 = arith.constant 0 : index
    %13 = vector.load %arg6[%c0_11, %c0_12] : memref<8x64xf32, #tpu.memory_space<vmem>>, vector<8x64xf32>
    tpu.vector_store %arg6[%c0_11, %c0_12], %12 {strides = array<i32>} : memref<8x64xf32, #tpu.memory_space<vmem>>, vector<8x64xf32>,
    return
  }
  func.func @transform_0(%arg0: i32) -> (i32, i32) {
    %c0_i32 = arith.constant 0 : i32
    %c0_i32_0 = arith.constant 0 : i32
    return %arg0, %c0_i32 : i32, i32
  }
  func.func @transform_1(%arg0: i32) -> (i32, i32) {
    %c0_i32 = arith.constant 0 : i32
    %c0_i32_0 = arith.constant 0 : i32
    %c0_i32_1 = arith.constant 0 : i32
    return %c0_i32, %c0_i32_0 : i32, i32
  }
  func.func @transform_2(%arg0: i32) -> (i32, i32) {
    %c0_i32 = arith.constant 0 : i32
    %c0_i32_0 = arith.constant 0 : i32
    %c0_i32_1 = arith.constant 0 : i32
    return %c0_i32, %c0_i32_0 : i32, i32
  }
  func.func @transform_3(%arg0: i32) -> (i32, i32) {
    %c0_i32 = arith.constant 0 : i32
    %c0_i32_0 = arith.constant 0 : i32
    %c0_i32_1 = arith.constant 0 : i32
    return %c0_i32, %c0_i32_0 : i32, i32
  }
  func.func @transform_4(%arg0: i32) -> (i32, i32) {
    %c0_i32 = arith.constant 0 : i32
    %c0_i32_0 = arith.constant 0 : i32
    %c0_i32_1 = arith.constant 0 : i32
    return %c0_i32, %c0_i32_0 : i32, i32
  }
  func.func @transform_5(%arg0: i32) -> (i32, i32) {
    %c0_i32 = arith.constant 0 : i32
    %c0_i32_0 = arith.constant 0 : i32
    return %arg0, %c0_i32 : i32, i32
  }
}

</mosaic_0001>

<llo_original>
// kernel: tpu_custom_call.1
$region0: #{tpu_custom_call.1}
  #allocation0 [shape = 'u32[]', space=smem, size = 0x4, offset = 0x4, fixed_abs, tag = 'smem constant byte address 0x4 - core index']
  #allocation1 [shape = 'u32[144,128]{1,0:T(1,128)}', space=vmem, size = 0x12000, scoped, tag = 'internal scratch']
  %s0 = inlined_call_operand.vmem [shape: f32[8,256], index: 0, kind: input, shape index: {}]
  %s1 = inlined_call_operand.hbm [shape: f32[256,128], index: 1, kind: input, shape index: {}]
  %s2 = inlined_call_operand.vmem [shape: f32[1,128], index: 2, kind: input, shape index: {}]
  %s3 = inlined_call_operand.vmem [shape: f32[128,64], index: 3, kind: input, shape index: {}]
  %s4 = inlined_call_operand.vmem [shape: f32[1,64], index: 4, kind: input, shape index: {}]
  %s5 = inlined_call_operand.hbm [shape: f32[8,64], index: 5, kind: output, shape index: {}]
  %s6 = sld [smem:[#allocation0]]
  $region34: #{tpu_custom_call.1} parent=0
    _
  %s8 = ssub.s32 1, %s6
  %s9 = scalar_select 0, %s8, %s6
  $region1: #{tpu_custom_call.1} parent=0
    #allocation2 [shape = 'u8[131072]{0}', space=vmem, size = 0x20000, scoped, tag = 'input window, operand 1, single buffered']
    #allocation3 [shape = 's32[1]{0}', space=sflag, size = 0x4, scoped, tag = 'scoped memory for tpu_custom_call.1']
    #allocation4 [shape = 's32[1]{0}', space=sflag, size = 0x4, scoped, tag = 'scoped memory for tpu_custom_call.1']
    #allocation5 [shape = 'u8[4096]{0}', space=vmem, size = 0x1000, scoped, tag = 'output window, operand 0, single buffered']
    %10 = vsyncpa [#allocation3], 0
    %11 = vsyncpa [#allocation4], 0
    // Predicated region
    $region2: #{tpu_custom_call.1} parent=1 // pred_check
      _
    $region3: #{tpu_custom_call.1} parent=1 // pred_check_branch
      %13 = sbr.rel (0) target = $region5
    $region4: #{tpu_custom_call.1} parent=1 // pred_region
      _
    $region5: #{tpu_custom_call.1} parent=1 // pred_fallthru
      _
    // Predicated region
    $region6: #{tpu_custom_call.1} parent=1 // pred_check
      _
    $region7: #{tpu_custom_call.1} parent=1 // pred_check_branch
      %15 = sbr.rel (0) target = $region9
    $region8: #{tpu_custom_call.1} parent=1 // pred_region
      %s17 = ssub.s32 4096, 4096
      %18 = vsyncadd [#allocation3], %s17
      %s19 = sshll.u32 [#allocation2], 4
      %s20 = int_to_ptr.vmem [resolvable:$true] %s19
      %25 = dma.hbm_to_vmem [thread:$0]  %s1, 4096, %s20, [#allocation3], 128, 128, 8
    $region9: #{tpu_custom_call.1} parent=1 // pred_fallthru
      _
    // Predicated region
    $region10: #{tpu_custom_call.1} parent=1 // pred_check
      _
    $region11: #{tpu_custom_call.1} parent=1 // pred_check_branch
      %27 = sbr.rel (0) target = $region13
    $region12: #{tpu_custom_call.1} parent=1 // pred_region
      _
    $region13: #{tpu_custom_call.1} parent=1 // pred_fallthru
      _
    // Predicated region
    $region14: #{tpu_custom_call.1} parent=1 // pred_check
      _
    $region15: #{tpu_custom_call.1} parent=1 // pred_check_branch
      %29 = sbr.rel (0) target = $region17
    $region16: #{tpu_custom_call.1} parent=1 // pred_region
      _
    $region17: #{tpu_custom_call.1} parent=1 // pred_fallthru
      _
    // Predicated region
    $region18: #{tpu_custom_call.1} parent=1 // pred_check
      _
    $region19: #{tpu_custom_call.1} parent=1 // pred_check_branch
      %31 = sbr.rel (0) target = $region21
    $region20: #{tpu_custom_call.1} parent=1 // pred_region
      _
    $region21: #{tpu_custom_call.1} parent=1 // pred_fallthru
      _
    // Predicated region
    $region22: #{tpu_custom_call.1} parent=1 // pred_check
      _
    $region23: #{tpu_custom_call.1} parent=1 // pred_check_branch
      %33 = sbr.rel (0) target = $region25
    $region24: #{tpu_custom_call.1} parent=1 // pred_region
      %34 = dma.done [#allocation3], 4096
    $region25: #{tpu_custom_call.1} parent=1 // pred_fallthru
      _
    %v35 = vld [vmem:[%s0] sm:$0xff]
    %v36 = vld [vmem:[%s0 + $0x8] sm:$0xff]
    %v37 = vld [vmem:[#allocation2] sm:$0xff]
    %v38 = vld [vmem:[#allocation2 + $0x8] sm:$0xff]
    %v39 = vld [vmem:[#allocation2 + $0x10] sm:$0xff]
    %v40 = vld [vmem:[#allocation2 + $0x18] sm:$0xff]
    %v41 = vld [vmem:[#allocation2 + $0x20] sm:$0xff]
    %v42 = vld [vmem:[#allocation2 + $0x28] sm:$0xff]
    %v43 = vld [vmem:[#allocation2 + $0x30] sm:$0xff]
    %v44 = vld [vmem:[#allocation2 + $0x38] sm:$0xff]
    %v45 = vld [vmem:[#allocation2 + $0x40] sm:$0xff]
    %v46 = vld [vmem:[#allocation2 + $0x48] sm:$0xff]
    %v47 = vld [vmem:[#allocation2 + $0x50] sm:$0xff]
    %v48 = vld [vmem:[#allocation2 + $0x58] sm:$0xff]
    %v49 = vld [vmem:[#allocation2 + $0x60] sm:$0xff]
    %v50 = vld [vmem:[#allocation2 + $0x68] sm:$0xff]
    %v51 = vld [vmem:[#allocation2 + $0x70] sm:$0xff]
    %v52 = vld [vmem:[#allocation2 + $0x78] sm:$0xff]
    %v53 = vld [vmem:[#allocation2 + $0x80] sm:$0xff]
    %v54 = vld [vmem:[#allocation2 + $0x88] sm:$0xff]
    %v55 = vld [vmem:[#allocation2 + $0x90] sm:$0xff]
    %v56 = vld [vmem:[#allocation2 + $0x98] sm:$0xff]
    %v57 = vld [vmem:[#allocation2 + $0xa0] sm:$0xff]
    %v58 = vld [vmem:[#allocation2 + $0xa8] sm:$0xff]
    %v59 = vld [vmem:[#allocation2 + $0xb0] sm:$0xff]
    %v60 = vld [vmem:[#allocation2 + $0xb8] sm:$0xff]
    %v61 = vld [vmem:[#allocation2 + $0xc0] sm:$0xff]
    %v62 = vld [vmem:[#allocation2 + $0xc8] sm:$0xff]
    %v63 = vld [vmem:[#allocation2 + $0xd0] sm:$0xff]
    %v64 = vld [vmem:[#allocation2 + $0xd8] sm:$0xff]
    %v65 = vld [vmem:[#allocation2 + $0xe0] sm:$0xff]
    %v66 = vld [vmem:[#allocation2 + $0xe8] sm:$0xff]
    %v67 = vld [vmem:[#allocation2 + $0xf0] sm:$0xff]
    %v68 = vld [vmem:[#allocation2 + $0xf8] sm:$0xff]
    %v69 = vld [vmem:[%s2] sm:$0x1]
    %v71 = vlaneseq
    %v72 = vshrl.u32 %v71, 7
    %v73 = vsub.s32 0, %v72
    %v74 = vrot.slane %v69, %v73
    %76 = vmatprep.subr.mxu0 0.0
    %77 = vmatpush1.msra.mxu0 %v37
    %78 = vmatprep.subr.mxu0 0.0
    %79 = vmatpush1.msra.mxu0 %v38
    %80 = vmatprep.subr.mxu0 0.0
    %81 = vmatpush1.msra.mxu0 %v39
    %82 = vmatprep.subr.mxu0 0.0
    %83 = vmatpush1.msra.mxu0 %v40
    %84 = vmatprep.subr.mxu0 0.0
    %85 = vmatpush1.msra.mxu0 %v41
    %86 = vmatprep.subr.mxu0 0.0
    %87 = vmatpush1.msra.mxu0 %v42
    %88 = vmatprep.subr.mxu0 0.0
    %89 = vmatpush1.msra.mxu0 %v43
    %90 = vmatprep.subr.mxu0 0.0
    %91 = vmatpush1.msra.mxu0 %v44
    %92 = vmatprep.subr.mxu0 0.0
    %93 = vmatpush1.msra.mxu0 %v45
    %94 = vmatprep.subr.mxu0 0.0
    %95 = vmatpush1.msra.mxu0 %v46
    %96 = vmatprep.subr.mxu0 0.0
    %97 = vmatpush1.msra.mxu0 %v47
    %98 = vmatprep.subr.mxu0 0.0
    %99 = vmatpush1.msra.mxu0 %v48
    %100 = vmatprep.subr.mxu0 0.0
    %101 = vmatpush1.msra.mxu0 %v49
    %102 = vmatprep.subr.mxu0 0.0
    %103 = vmatpush1.msra.mxu0 %v50
    %104 = vmatprep.subr.mxu0 0.0
    %105 = vmatpush1.msra.mxu0 %v51
    %106 = vmatprep.subr.mxu0 0.0
    %107 = vmatpush1.msra.mxu0 %v52
    %108 = vmatprep.subr.mxu0 0.0
    %109 = vmatpush1.msra.mxu0 %v53
    %110 = vmatprep.subr.mxu0 0.0
    %111 = vmatpush1.msra.mxu0 %v54
    %112 = vmatprep.subr.mxu0 0.0
    %113 = vmatpush1.msra.mxu0 %v55
    %114 = vmatprep.subr.mxu0 0.0
    %115 = vmatpush1.msra.mxu0 %v56
    %116 = vmatprep.subr.mxu0 0.0
    %117 = vmatpush1.msra.mxu0 %v57
    %118 = vmatprep.subr.mxu0 0.0
    %119 = vmatpush1.msra.mxu0 %v58
    %120 = vmatprep.subr.mxu0 0.0
    %121 = vmatpush1.msra.mxu0 %v59
    %122 = vmatprep.subr.mxu0 0.0
    %123 = vmatpush1.msra.mxu0 %v60
    %124 = vmatprep.subr.mxu0 0.0
    %125 = vmatpush1.msra.mxu0 %v61
    %126 = vmatprep.subr.mxu0 0.0
    %127 = vmatpush1.msra.mxu0 %v62
    %128 = vmatprep.subr.mxu0 0.0
    %129 = vmatpush1.msra.mxu0 %v63
    %130 = vmatprep.subr.mxu0 0.0
    %131 = vmatpush1.msra.mxu0 %v64
    %132 = vmatprep.subr.mxu0 0.0
    %133 = vmatpush1.msra.mxu0 %v65
    %134 = vmatprep.subr.mxu0 0.0
    %135 = vmatpush1.msra.mxu0 %v66
    %136 = vmatprep.subr.mxu0 0.0
    %137 = vmatpush1.msra.mxu0 %v67
    %138 = vmatprep.subr.mxu0 0.0
    %139 = vmatpush1.msra.mxu0 %v68
    %140 = vmatprep.mubr.f32.mxu0 %v36
    %141 = vmatmul.mubr.f32.gmra.mrb[0].mxu0 %v35
    %v142 = vpop.f32.mrb[0].mxu0
    %v143 = vadd.f32 %v74, %v142
    %v144 = vpop.f32.mrb[0].mxu0
    %145 = vdwg.mxu0
    %v146 = vmax.f32 %v143, 0.0
    %v147 = vld [vmem:[%s3] sm:$0xff]
    %v148 = vld [vmem:[%s3 + $0x8] sm:$0xff]
    %v149 = vld [vmem:[%s3 + $0x10] sm:$0xff]
    %v150 = vld [vmem:[%s3 + $0x18] sm:$0xff]
    %v151 = vld [vmem:[%s3 + $0x20] sm:$0xff]
    %v152 = vld [vmem:[%s3 + $0x28] sm:$0xff]
    %v153 = vld [vmem:[%s3 + $0x30] sm:$0xff]
    %v154 = vld [vmem:[%s3 + $0x38] sm:$0xff]
    %v155 = vld [vmem:[%s3 + $0x40] sm:$0xff]
    %v156 = vld [vmem:[%s3 + $0x48] sm:$0xff]
    %v157 = vld [vmem:[%s3 + $0x50] sm:$0xff]
    %v158 = vld [vmem:[%s3 + $0x58] sm:$0xff]
    %v159 = vld [vmem:[%s3 + $0x60] sm:$0xff]
    %v160 = vld [vmem:[%s3 + $0x68] sm:$0xff]
    %v161 = vld [vmem:[%s3 + $0x70] sm:$0xff]
    %v162 = vld [vmem:[%s3 + $0x78] sm:$0xff]
    %v163 = vld [vmem:[%s4] sm:$0x1]
    %v165 = vlaneseq
    %v166 = vshrl.u32 %v165, 7
    %v167 = vsub.s32 0, %v166
    %v168 = vrot.slane %v163, %v167
    %170 = vmatprep.subr.mxu0 0.0
    %171 = vmatpush1.msra.mxu0 %v147
    %172 = vmatprep.subr.mxu0 0.0
    %173 = vmatpush1.msra.mxu0 %v148
    %174 = vmatprep.subr.mxu0 0.0
    %175 = vmatpush1.msra.mxu0 %v149
    %176 = vmatprep.subr.mxu0 0.0
    %177 = vmatpush1.msra.mxu0 %v150
    %178 = vmatprep.subr.mxu0 0.0
    %179 = vmatpush1.msra.mxu0 %v151
    %180 = vmatprep.subr.mxu0 0.0
    %181 = vmatpush1.msra.mxu0 %v152
    %182 = vmatprep.subr.mxu0 0.0
    %183 = vmatpush1.msra.mxu0 %v153
    %184 = vmatprep.subr.mxu0 0.0
    %185 = vmatpush1.msra.mxu0 %v154
    %186 = vmatprep.subr.mxu0 0.0
    %187 = vmatpush1.msra.mxu0 %v155
    %188 = vmatprep.subr.mxu0 0.0
    %189 = vmatpush1.msra.mxu0 %v156
    %190 = vmatprep.subr.mxu0 0.0
    %191 = vmatpush1.msra.mxu0 %v157
    %192 = vmatprep.subr.mxu0 0.0
    %193 = vmatpush1.msra.mxu0 %v158
    %194 = vmatprep.subr.mxu0 0.0
    %195 = vmatpush1.msra.mxu0 %v159
    %196 = vmatprep.subr.mxu0 0.0
    %197 = vmatpush1.msra.mxu0 %v160
    %198 = vmatprep.subr.mxu0 0.0
    %199 = vmatpush1.msra.mxu0 %v161
    %200 = vmatprep.subr.mxu0 0.0
    %201 = vmatpush1.msra.mxu0 %v162
    %202 = vmatprep.subr.mxu0 0.0
    %203 = vmatpush1.msra.mxu0 0.0
    %204 = vmatprep.subr.mxu0 0.0
    %205 = vmatpush1.msra.mxu0 0.0
    %206 = vmatprep.subr.mxu0 0.0
    %207 = vmatpush1.msra.mxu0 0.0
    %208 = vmatprep.subr.mxu0 0.0
    %209 = vmatpush1.msra.mxu0 0.0
    %210 = vmatprep.subr.mxu0 0.0
    %211 = vmatpush1.msra.mxu0 0.0
    %212 = vmatprep.subr.mxu0 0.0
    %213 = vmatpush1.msra.mxu0 0.0
    %214 = vmatprep.subr.mxu0 0.0
    %215 = vmatpush1.msra.mxu0 0.0
    %216 = vmatprep.subr.mxu0 0.0
    %217 = vmatpush1.msra.mxu0 0.0
    %218 = vmatprep.subr.mxu0 0.0
    %219 = vmatpush1.msra.mxu0 0.0
    %220 = vmatprep.subr.mxu0 0.0
    %221 = vmatpush1.msra.mxu0 0.0
    %222 = vmatprep.subr.mxu0 0.0
    %223 = vmatpush1.msra.mxu0 0.0
    %224 = vmatprep.subr.mxu0 0.0
    %225 = vmatpush1.msra.mxu0 0.0
    %226 = vmatprep.subr.mxu0 0.0
    %227 = vmatpush1.msra.mxu0 0.0
    %228 = vmatprep.subr.mxu0 0.0
    %229 = vmatpush1.msra.mxu0 0.0
    %230 = vmatprep.subr.mxu0 0.0
    %231 = vmatpush1.msra.mxu0 0.0
    %232 = vmatprep.subr.mxu0 0.0
    %233 = vmatpush1.msra.mxu0 0.0
    %234 = vmatprep.mubr.f32.mxu0 0.0
    %235 = vmatmul.mubr.f32.gmra.mrb[0].mxu0 %v146
    %v236 = vpop.f32.mrb[0].mxu0
    %v237 = vadd.f32 %v168, %v236
    %v238 = vpop.f32.mrb[0].mxu0
    %239 = vdwg.mxu0
    %vm240 = vcmask 523264
    %241 = vst.msk [vmem:[#allocation5] sm:$0xff] %vm240, %v237
    // Predicated region
    $region26: #{tpu_custom_call.1} parent=1 // pred_check
      _
    $region27: #{tpu_custom_call.1} parent=1 // pred_check_branch
      %243 = sbr.rel (0) target = $region29
    $region28: #{tpu_custom_call.1} parent=1 // pred_region
      %s245 = ssub.s32 128, 128
      %246 = vsyncadd [#allocation4], %s245
      %s248 = sshll.u32 [#allocation5], 4
      %s249 = int_to_ptr.vmem [resolvable:$true] %s248
      %251 = dma.vmem_to_hbm [thread:$0]  %s249, 128, %s5, [#allocation4]
    $region29: #{tpu_custom_call.1} parent=1 // pred_fallthru
      _
    // Predicated region
    $region30: #{tpu_custom_call.1} parent=1 // pred_check
      _
    $region31: #{tpu_custom_call.1} parent=1 // pred_check_branch
      %253 = sbr.rel (0) target = $region33
    $region32: #{tpu_custom_call.1} parent=1 // pred_region
      %254 = dma.done [#allocation4], 128
    $region33: #{tpu_custom_call.1} parent=1 // pred_fallthru
      _
    %255 = vsyncpa [#allocation3], 1
    %256 = vsyncpa [#allocation4], 1

// kernel: tpu_custom_call.1
$region0: #{tpu_custom_call.1}
  #allocation0 [shape = 'u32[]', space=smem, size = 0x4, offset = 0x4, fixed_abs, tag = 'smem constant byte address 0x4 - core index']
  #allocation1 [shape = 'u32[144,128]{1,0:T(1,128)}', space=vmem, size = 0x12000, scoped, tag = 'internal scratch']
  %s0 = inlined_call_operand.vmem [shape: f32[8,256], index: 0, kind: input, shape index: {}]
  %s1 = inlined_call_operand.hbm [shape: f32[256,128], index: 1, kind: input, shape index: {}]
  %s2 = inlined_call_operand.vmem [shape: f32[1,128], index: 2, kind: input, shape index: {}]
  %s3 = inlined_call_operand.vmem [shape: f32[128,64], index: 3, kind: input, shape index: {}]
  %s4 = inlined_call_operand.vmem [shape: f32[1,64], index: 4, kind: input, shape index: {}]
  %s5 = inlined_call_operand.hbm [shape: f32[8,64], index: 5, kind: output, shape index: {}]
  %s6 = sld [smem:[#allocation0]]
  $region34: #{tpu_custom_call.1} parent=0
    _
  %s8 = ssub.s32 1, %s6
  %s9 = scalar_select 0, %s8, %s6
  $region1: #{tpu_custom_call.1} parent=0
    #allocation2 [shape = 'u8[131072]{0}', space=vmem, size = 0x20000, scoped, tag = 'input window, operand 1, single buffered']
    #allocation3 [shape = 's32[1]{0}', space=sflag, size = 0x4, scoped, tag = 'scoped memory for tpu_custom_call.1']
    #allocation4 [shape = 's32[1]{0}', space=sflag, size = 0x4, scoped, tag = 'scoped memory for tpu_custom_call.1']
    #allocation5 [shape = 'u8[4096]{0}', space=vmem, size = 0x1000, scoped, tag = 'output window, operand 0, single buffered']
    %10 = vsyncpa [#allocation3], 0
    %11 = vsyncpa [#allocation4], 0
    // Predicated region
    $region2: #{tpu_custom_call.1} parent=1 // pred_check
      _
    $region3: #{tpu_custom_call.1} parent=1 // pred_check_branch
      %13 = sbr.rel (0) target = $region5
    $region4: #{tpu_custom_call.1} parent=1 // pred_region
      _
    $region5: #{tpu_custom_call.1} parent=1 // pred_fallthru
      _
    // Predicated region
    $region6: #{tpu_custom_call.1} parent=1 // pred_check
      _
    $region7: #{tpu_custom_call.1} parent=1 // pred_check_branch
      %15 = sbr.rel (0) target = $region9
    $region8: #{tpu_custom_call.1} parent=1 // pred_region
      %s17 = ssub.s32 4096, 4096
      %18 = vsyncadd [#allocation3], %s17
      %s19 = sshll.u32 [#allocation2], 4
      %s20 = int_to_ptr.vmem [resolvable:$true] %s19
      %25 = dma.hbm_to_vmem [thread:$0]  %s1, 4096, %s20, [#allocation3], 128, 128, 8
    $region9: #{tpu_custom_call.1} parent=1 // pred_fallthru
      _
    // Predicated region
    $region10: #{tpu_custom_call.1} parent=1 // pred_check
      _
    $region11: #{tpu_custom_call.1} parent=1 // pred_check_branch
      %27 = sbr.rel (0) target = $region13
    $region12: #{tpu_custom_call.1} parent=1 // pred_region
      _
    $region13: #{tpu_custom_call.1} parent=1 // pred_fallthru
      _
    // Predicated region
    $region14: #{tpu_custom_call.1} parent=1 // pred_check
      _
    $region15: #{tpu_custom_call.1} parent=1 // pred_check_branch
      %29 = sbr.rel (0) target = $region17
    $region16: #{tpu_custom_call.1} parent=1 // pred_region
      _
    $region17: #{tpu_custom_call.1} parent=1 // pred_fallthru
      _
    // Predicated region
    $region18: #{tpu_custom_call.1} parent=1 // pred_check
      _
    $region19: #{tpu_custom_call.1} parent=1 // pred_check_branch
      %31 = sbr.rel (0) target = $region21
    $region20: #{tpu_custom_call.1} parent=1 // pred_region
      _
    $region21: #{tpu_custom_call.1} parent=1 // pred_fallthru
      _
    // Predicated region
    $region22: #{tpu_custom_call.1} parent=1 // pred_check
      _
    $region23: #{tpu_custom_call.1} parent=1 // pred_check_branch
      %33 = sbr.rel (0) target = $region25
    $region24: #{tpu_custom_call.1} parent=1 // pred_region
      %34 = dma.done [#allocation3], 4096
    $region25: #{tpu_custom_call.1} parent=1 // pred_fallthru
      _
    %v35 = vld [vmem:[%s0] sm:$0xff]
    %v36 = vld [vmem:[%s0 + $0x8] sm:$0xff]
    %v37 = vld [vmem:[#allocation2] sm:$0xff]
    %v38 = vld [vmem:[#allocation2 + $0x8] sm:$0xff]
    %v39 = vld [vmem:[#allocation2 + $0x10] sm:$0xff]
    %v40 = vld [vmem:[#allocation2 + $0x18] sm:$0xff]
    %v41 = vld [vmem:[#allocation2 + $0x20] sm:$0xff]
    %v42 = vld [vmem:[#allocation2 + $0x28] sm:$0xff]
    %v43 = vld [vmem:[#allocation2 + $0x30] sm:$0xff]
    %v44 = vld [vmem:[#allocation2 + $0x38] sm:$0xff]
    %v45 = vld [vmem:[#allocation2 + $0x40] sm:$0xff]
    %v46 = vld [vmem:[#allocation2 + $0x48] sm:$0xff]
    %v47 = vld [vmem:[#allocation2 + $0x50] sm:$0xff]
    %v48 = vld [vmem:[#allocation2 + $0x58] sm:$0xff]
    %v49 = vld [vmem:[#allocation2 + $0x60] sm:$0xff]
    %v50 = vld [vmem:[#allocation2 + $0x68] sm:$0xff]
    %v51 = vld [vmem:[#allocation2 + $0x70] sm:$0xff]
    %v52 = vld [vmem:[#allocation2 + $0x78] sm:$0xff]
    %v53 = vld [vmem:[#allocation2 + $0x80] sm:$0xff]
    %v54 = vld [vmem:[#allocation2 + $0x88] sm:$0xff]
    %v55 = vld [vmem:[#allocation2 + $0x90] sm:$0xff]
    %v56 = vld [vmem:[#allocation2 + $0x98] sm:$0xff]
    %v57 = vld [vmem:[#allocation2 + $0xa0] sm:$0xff]
    %v58 = vld [vmem:[#allocation2 + $0xa8] sm:$0xff]
    %v59 = vld [vmem:[#allocation2 + $0xb0] sm:$0xff]
    %v60 = vld [vmem:[#allocation2 + $0xb8] sm:$0xff]
    %v61 = vld [vmem:[#allocation2 + $0xc0] sm:$0xff]
    %v62 = vld [vmem:[#allocation2 + $0xc8] sm:$0xff]
    %v63 = vld [vmem:[#allocation2 + $0xd0] sm:$0xff]
    %v64 = vld [vmem:[#allocation2 + $0xd8] sm:$0xff]
    %v65 = vld [vmem:[#allocation2 + $0xe0] sm:$0xff]
    %v66 = vld [vmem:[#allocation2 + $0xe8] sm:$0xff]
    %v67 = vld [vmem:[#allocation2 + $0xf0] sm:$0xff]
    %v68 = vld [vmem:[#allocation2 + $0xf8] sm:$0xff]
    %v69 = vld [vmem:[%s2] sm:$0x1]
    %v71 = vlaneseq
    %v72 = vshrl.u32 %v71, 7
    %v73 = vsub.s32 0, %v72
    %v74 = vrot.slane %v69, %v73
    %76 = vmatprep.subr.mxu0 0.0
    %77 = vmatpush1.msra.mxu0 %v37
    %78 = vmatprep.subr.mxu0 0.0
    %79 = vmatpush1.msra.mxu0 %v38
    %80 = vmatprep.subr.mxu0 0.0
    %81 = vmatpush1.msra.mxu0 %v39
    %82 = vmatprep.subr.mxu0 0.0
    %83 = vmatpush1.msra.mxu0 %v40
    %84 = vmatprep.subr.mxu0 0.0
    %85 = vmatpush1.msra.mxu0 %v41
    %86 = vmatprep.subr.mxu0 0.0
    %87 = vmatpush1.msra.mxu0 %v42
    %88 = vmatprep.subr.mxu0 0.0
    %89 = vmatpush1.msra.mxu0 %v43
    %90 = vmatprep.subr.mxu0 0.0
    %91 = vmatpush1.msra.mxu0 %v44
    %92 = vmatprep.subr.mxu0 0.0
    %93 = vmatpush1.msra.mxu0 %v45
    %94 = vmatprep.subr.mxu0 0.0
    %95 = vmatpush1.msra.mxu0 %v46
    %96 = vmatprep.subr.mxu0 0.0
    %97 = vmatpush1.msra.mxu0 %v47
    %98 = vmatprep.subr.mxu0 0.0
    %99 = vmatpush1.msra.mxu0 %v48
    %100 = vmatprep.subr.mxu0 0.0
    %101 = vmatpush1.msra.mxu0 %v49
    %102 = vmatprep.subr.mxu0 0.0
    %103 = vmatpush1.msra.mxu0 %v50
    %104 = vmatprep.subr.mxu0 0.0
    %105 = vmatpush1.msra.mxu0 %v51
    %106 = vmatprep.subr.mxu0 0.0
    %107 = vmatpush1.msra.mxu0 %v52
    %108 = vmatprep.subr.mxu0 0.0
    %109 = vmatpush1.msra.mxu0 %v53
    %110 = vmatprep.subr.mxu0 0.0
    %111 = vmatpush1.msra.mxu0 %v54
    %112 = vmatprep.subr.mxu0 0.0
    %113 = vmatpush1.msra.mxu0 %v55
    %114 = vmatprep.subr.mxu0 0.0
    %115 = vmatpush1.msra.mxu0 %v56
    %116 = vmatprep.subr.mxu0 0.0
    %117 = vmatpush1.msra.mxu0 %v57
    %118 = vmatprep.subr.mxu0 0.0
    %119 = vmatpush1.msra.mxu0 %v58
    %120 = vmatprep.subr.mxu0 0.0
    %121 = vmatpush1.msra.mxu0 %v59
    %122 = vmatprep.subr.mxu0 0.0
    %123 = vmatpush1.msra.mxu0 %v60
    %124 = vmatprep.subr.mxu0 0.0
    %125 = vmatpush1.msra.mxu0 %v61
    %126 = vmatprep.subr.mxu0 0.0
    %127 = vmatpush1.msra.mxu0 %v62
    %128 = vmatprep.subr.mxu0 0.0
    %129 = vmatpush1.msra.mxu0 %v63
    %130 = vmatprep.subr.mxu0 0.0
    %131 = vmatpush1.msra.mxu0 %v64
    %132 = vmatprep.subr.mxu0 0.0
    %133 = vmatpush1.msra.mxu0 %v65
    %134 = vmatprep.subr.mxu0 0.0
    %135 = vmatpush1.msra.mxu0 %v66
    %136 = vmatprep.subr.mxu0 0.0
    %137 = vmatpush1.msra.mxu0 %v67
    %138 = vmatprep.subr.mxu0 0.0
    %139 = vmatpush1.msra.mxu0 %v68
    %140 = vmatprep.mubr.f32.mxu0 %v36
    %141 = vmatmul.mubr.f32.gmra.mrb[0].mxu0 %v35
    %v142 = vpop.f32.mrb[0].mxu0
    %v143 = vadd.f32 %v74, %v142
    %v144 = vpop.f32.mrb[0].mxu0
    %145 = vdwg.mxu0
    %v146 = vmax.f32 %v143, 0.0
    %v147 = vld [vmem:[%s3] sm:$0xff]
    %v148 = vld [vmem:[%s3 + $0x8] sm:$0xff]
    %v149 = vld [vmem:[%s3 + $0x10] sm:$0xff]
    %v150 = vld [vmem:[%s3 + $0x18] sm:$0xff]
    %v151 = vld [vmem:[%s3 + $0x20] sm:$0xff]
    %v152 = vld [vmem:[%s3 + $0x28] sm:$0xff]
    %v153 = vld [vmem:[%s3 + $0x30] sm:$0xff]
    %v154 = vld [vmem:[%s3 + $0x38] sm:$0xff]
    %v155 = vld [vmem:[%s3 + $0x40] sm:$0xff]
    %v156 = vld [vmem:[%s3 + $0x48] sm:$0xff]
    %v157 = vld [vmem:[%s3 + $0x50] sm:$0xff]
    %v158 = vld [vmem:[%s3 + $0x58] sm:$0xff]
    %v159 = vld [vmem:[%s3 + $0x60] sm:$0xff]
    %v160 = vld [vmem:[%s3 + $0x68] sm:$0xff]
    %v161 = vld [vmem:[%s3 + $0x70] sm:$0xff]
    %v162 = vld [vmem:[%s3 + $0x78] sm:$0xff]
    %v163 = vld [vmem:[%s4] sm:$0x1]
    %v165 = vlaneseq
    %v166 = vshrl.u32 %v165, 7
    %v167 = vsub.s32 0, %v166
    %v168 = vrot.slane %v163, %v167
    %170 = vmatprep.subr.mxu0 0.0
    %171 = vmatpush1.msra.mxu0 %v147
    %172 = vmatprep.subr.mxu0 0.0
    %173 = vmatpush1.msra.mxu0 %v148
    %174 = vmatprep.subr.mxu0 0.0
    %175 = vmatpush1.msra.mxu0 %v149
    %176 = vmatprep.subr.mxu0 0.0
    %177 = vmatpush1.msra.mxu0 %v150
    %178 = vmatprep.subr.mxu0 0.0
    %179 = vmatpush1.msra.mxu0 %v151
    %180 = vmatprep.subr.mxu0 0.0
    %181 = vmatpush1.msra.mxu0 %v152
    %182 = vmatprep.subr.mxu0 0.0
    %183 = vmatpush1.msra.mxu0 %v153
    %184 = vmatprep.subr.mxu0 0.0
    %185 = vmatpush1.msra.mxu0 %v154
    %186 = vmatprep.subr.mxu0 0.0
    %187 = vmatpush1.msra.mxu0 %v155
    %188 = vmatprep.subr.mxu0 0.0
    %189 = vmatpush1.msra.mxu0 %v156
    %190 = vmatprep.subr.mxu0 0.0
    %191 = vmatpush1.msra.mxu0 %v157
    %192 = vmatprep.subr.mxu0 0.0
    %193 = vmatpush1.msra.mxu0 %v158
    %194 = vmatprep.subr.mxu0 0.0
    %195 = vmatpush1.msra.mxu0 %v159
    %196 = vmatprep.subr.mxu0 0.0
    %197 = vmatpush1.msra.mxu0 %v160
    %198 = vmatprep.subr.mxu0 0.0
    %199 = vmatpush1.msra.mxu0 %v161
    %200 = vmatprep.subr.mxu0 0.0
    %201 = vmatpush1.msra.mxu0 %v162
    %202 = vmatprep.subr.mxu0 0.0
    %203 = vmatpush1.msra.mxu0 0.0
    %204 = vmatprep.subr.mxu0 0.0
    %205 = vmatpush1.msra.mxu0 0.0
    %206 = vmatprep.subr.mxu0 0.0
    %207 = vmatpush1.msra.mxu0 0.0
    %208 = vmatprep.subr.mxu0 0.0
    %209 = vmatpush1.msra.mxu0 0.0
    %210 = vmatprep.subr.mxu0 0.0
    %211 = vmatpush1.msra.mxu0 0.0
    %212 = vmatprep.subr.mxu0 0.0
    %213 = vmatpush1.msra.mxu0 0.0
    %214 = vmatprep.subr.mxu0 0.0
    %215 = vmatpush1.msra.mxu0 0.0
    %216 = vmatprep.subr.mxu0 0.0
    %217 = vmatpush1.msra.mxu0 0.0
    %218 = vmatprep.subr.mxu0 0.0
    %219 = vmatpush1.msra.mxu0 0.0
    %220 = vmatprep.subr.mxu0 0.0
    %221 = vmatpush1.msra.mxu0 0.0
    %222 = vmatprep.subr.mxu0 0.0
    %223 = vmatpush1.msra.mxu0 0.0
    %224 = vmatprep.subr.mxu0 0.0
    %225 = vmatpush1.msra.mxu0 0.0
    %226 = vmatprep.subr.mxu0 0.0
    %227 = vmatpush1.msra.mxu0 0.0
    %228 = vmatprep.subr.mxu0 0.0
    %229 = vmatpush1.msra.mxu0 0.0
    %230 = vmatprep.subr.mxu0 0.0
    %231 = vmatpush1.msra.mxu0 0.0
    %232 = vmatprep.subr.mxu0 0.0
    %233 = vmatpush1.msra.mxu0 0.0
    %234 = vmatprep.mubr.f32.mxu0 0.0
    %235 = vmatmul.mubr.f32.gmra.mrb[0].mxu0 %v146
    %v236 = vpop.f32.mrb[0].mxu0
    %v237 = vadd.f32 %v168, %v236
    %v238 = vpop.f32.mrb[0].mxu0
    %239 = vdwg.mxu0
    %vm240 = vcmask 523264
    %241 = vst.msk [vmem:[#allocation5] sm:$0xff] %vm240, %v237
    // Predicated region
    $region26: #{tpu_custom_call.1} parent=1 // pred_check
      _
    $region27: #{tpu_custom_call.1} parent=1 // pred_check_branch
      %243 = sbr.rel (0) target = $region29
    $region28: #{tpu_custom_call.1} parent=1 // pred_region
      %s245 = ssub.s32 128, 128
      %246 = vsyncadd [#allocation4], %s245
      %s248 = sshll.u32 [#allocation5], 4
      %s249 = int_to_ptr.vmem [resolvable:$true] %s248
      %251 = dma.vmem_to_hbm [thread:$0]  %s249, 128, %s5, [#allocation4]
    $region29: #{tpu_custom_call.1} parent=1 // pred_fallthru
      _
    // Predicated region
    $region30: #{tpu_custom_call.1} parent=1 // pred_check
      _
    $region31: #{tpu_custom_call.1} parent=1 // pred_check_branch
      %253 = sbr.rel (0) target = $region33
    $region32: #{tpu_custom_call.1} parent=1 // pred_region
      %254 = dma.done [#allocation4], 128
    $region33: #{tpu_custom_call.1} parent=1 // pred_fallthru
      _
    %255 = vsyncpa [#allocation3], 1
    %256 = vsyncpa [#allocation4], 1

</llo_original>
